<compile_context>
chip_gen: v6e
topology: v6e:2x2x1
jax: 0.10.0
libtpu: 0.0.40
codegen_flags: <defaults>
</compile_context>

<pallas_src>
import functools
import numpy as np
import jax
import jax.numpy as jnp
from jax.experimental import pallas as pl
from jax.experimental.pallas import tpu as pltpu


def _round_up(x, m):
    return (x + m - 1) // m * m


def _tensorcores_per_device():
    """Conservative guess at TensorCores per JAX device (dual-TC: v4 / v5p / v7x)."""
    try:
        kind = jax.devices()[0].device_kind.lower()
    except Exception:
        return 1
    return 2 if any(tag in kind for tag in ("v4", "v5p", "v7")) else 1


_NUM_TC = _tensorcores_per_device()
# v5e/v6e have 128 MiB physical VMEM (raise the scoped limit for bigger tiles);
# v7x has 64 MiB total, so keep the matmul budget at 32 MiB there.
_MATMUL_VMEM = (64 if _NUM_TC == 1 else 32) * 1024 * 1024


# ---------------------------------------------------------------------------
# generic tiled (rows, K) @ (K, N) + bias kernel  (used for input proj and fc)
# ---------------------------------------------------------------------------
def _matmul_bias_kernel(x_ref, w_ref, b_ref, o_ref):
    # lhs is cast to the (bf16) weight dtype so the MXU runs at bf16 throughput;
    # accumulation stays f32; output dtype follows o_ref (f32 logits / bf16 xproj).
    x = x_ref[...].astype(w_ref.dtype)
    acc = jnp.dot(x, w_ref[...], preferred_element_type=jnp.float32) + b_ref[...]
    o_ref[...] = acc.astype(o_ref.dtype)


def _matmul_bias(x, w, b, out_dtype=jnp.float32):
    """Tiled matmul + bias.  N (= w.shape[1]) must be a multiple of 128."""
    rows, K = x.shape
    N = w.shape[1]
    assert N % 128 == 0, "pad N to a multiple of 128 before calling"
    # 256-wide N tiles fill a full 256x256 MXU pass on v6e/v7x; 128 also fine on v5e.
    tn = 256 if N % 256 == 0 else 128
    # bigger row tiles when there are many rows (v6e sweep: larger tiles -> closer to
    # HBM roofline); tiny row counts just round up to the sublane tile.
    if rows >= 512:
        tm = 512
    elif rows >= 256:
        tm = 256
    elif rows >= 128:
        tm = 128
    else:
        tm = _round_up(rows, 8)
    rows_pad = _round_up(rows, tm)
    if rows_pad != rows:
        x = jnp.pad(x, ((0, rows_pad - rows), (0, 0)))
    m_tiles, n_tiles = rows_pad // tm, N // tn

    # Stream the larger operand once.  Pallas only skips the re-DMA of a block when its
    # index is unchanged between consecutive grid steps, so put the axis the big operand
    # is constant over innermost.
    w_resident = w.size >= x.size
    if w_resident:
        grid = (n_tiles, m_tiles)                      # rows innermost -> W tile loaded once
        x_spec = pl.BlockSpec((tm, K), lambda j, i: (i, 0))
        w_spec = pl.BlockSpec((K, tn), lambda j, i: (0, j))
        b_spec = pl.BlockSpec((1, tn), lambda j, i: (0, j))
        o_spec = pl.BlockSpec((tm, tn), lambda j, i: (i, j))
    else:
        grid = (m_tiles, n_tiles)                      # N innermost -> activation tile loaded once
        x_spec = pl.BlockSpec((tm, K), lambda i, j: (i, 0))
        w_spec = pl.BlockSpec((K, tn), lambda i, j: (0, j))
        b_spec = pl.BlockSpec((1, tn), lambda i, j: (0, j))
        o_spec = pl.BlockSpec((tm, tn), lambda i, j: (i, j))

    out = pl.pallas_call(
        _matmul_bias_kernel,
        out_shape=jax.ShapeDtypeStruct((rows_pad, N), out_dtype),
        grid_spec=pltpu.PrefetchScalarGridSpec(
            num_scalar_prefetch=0,
            grid=grid,
            in_specs=[x_spec, w_spec, b_spec],
            out_specs=o_spec,
        ),
        # Both axes independent -> megacore-shardable on dual-TC parts.
        compiler_params=pltpu.CompilerParams(
            dimension_semantics=("parallel", "parallel"),
            vmem_limit_bytes=_MATMUL_VMEM),
        # NOTE: full-K contraction per tile; for very large K add a third ("arbitrary")
        # grid axis with an f32 VMEM accumulator.
    )(x, w, b)
    return out[:rows]


# ---------------------------------------------------------------------------
# LSTM recurrence kernel (time-major, time-blocked, h/c carried in VMEM scratch)
# ---------------------------------------------------------------------------
def _lstm_cell(gates, c_prev, H):
    # PyTorch gate order [i, f, g, o].  H is a multiple of 128 so gate slices are
    # lane-aligned (no cross-lane shuffles).
    i_g = jax.nn.sigmoid(gates[:, 0 * H:1 * H])
    f_g = jax.nn.sigmoid(gates[:, 1 * H:2 * H])
    g_g = jnp.tanh(gates[:, 2 * H:3 * H])
    o_g = jax.nn.sigmoid(gates[:, 3 * H:4 * H])
    c_new = f_g * c_prev + i_g * g_g
    h_new = o_g * jnp.tanh(c_new)
    return h_new, c_new


def _recurrence_kernel(xproj_ref, whh0_ref, wih_ref, whh_ref, bf_ref, hout_ref,
                       h_scr, c_scr, *, num_layers, hidden_size, t_blk):
    """Grid = (batch_tiles, time_blocks).  One grid step == t_blk timesteps of one tile."""
    @pl.when(pl.program_id(1) == 0)
    def _():
        h_scr[...] = jnp.zeros_like(h_scr)
        c_scr[...] = jnp.zeros_like(c_scr)

    H = hidden_size
    f32, bf16 = jnp.float32, jnp.bfloat16

    for tt in range(t_blk):                    # static unroll; t_blk is small
        # layer 0: x @ W_ih0 + biases precomputed for all timesteps (xproj, bf16);
        # only the recurrent dot sits on the sequential critical path.
        gates0 = (xproj_ref[tt].astype(f32)
                  + jnp.dot(h_scr[0], whh0_ref[...], preferred_element_type=f32))
        h_new, c_new = _lstm_cell(gates0, c_scr[0], H)
        x = h_new.astype(bf16)
        h_scr[0] = x
        c_scr[0] = c_new

        # layers >= 1: two dots (no concat / no cast on the recurrent chain).
        for l in range(1, num_layers):         # static unroll, num_layers is tiny
            gates = (jnp.dot(x, wih_ref[l - 1], preferred_element_type=f32)
                     + jnp.dot(h_scr[l], whh_ref[l - 1], preferred_element_type=f32)
                     + bf_ref[l - 1])
            h_new, c_new = _lstm_cell(gates, c_scr[l], H)
            x = h_new.astype(bf16)
            h_scr[l] = x
            c_scr[l] = c_new

        hout_ref[tt] = x                       # top-layer hidden state (bt, H), bf16


def _run_recurrence(xproj, params, *, num_layers, hidden_size):
    T, B_pad, G = xproj.shape
    H = hidden_size
    L = num_layers
    Lf = max(L - 1, 1)                         # dummy slot when L == 1 (unused in kernel)

    # Time blocking: a single grid step when the whole bf16 xproj fits comfortably in
    # VMEM, otherwise 8-step blocks (amortizes per-grid-step pipeline overhead).
    if T * B_pad * G * 2 <= 4 * 1024 * 1024:
        t_blk = T
    else:
        t_blk = 8
    T_pad = _round_up(T, t_blk)
    if T_pad != T:
        xproj = jnp.pad(xproj, ((0, T_pad - T), (0, 0), (0, 0)))

    # Batch split only on dual-TensorCore parts; v5e/v6e keep one tile (splitting there
    # just doubles grid steps and halves the already tiny MXU M-occupancy).
    if _NUM_TC >= 2 and B_pad % 32 == 0:
        bt = B_pad // 2
    else:
        bt = B_pad
    n_bt = B_pad // bt

    # NOTE(v7x): the stacked layer weights below are double-buffered by default; for
    # large H/L on 64 MiB-VMEM parts, mark them pipeline_mode=pl.Buffered(1) (their
    # index map is constant) to halve that footprint.
    kernel = functools.partial(_recurrence_kernel, num_layers=L, hidden_size=H,
                               t_blk=t_blk)
    h_top = pl.pallas_call(
        kernel,
        out_shape=jax.ShapeDtypeStruct((T_pad, B_pad, H), jnp.bfloat16),
        grid_spec=pltpu.PrefetchScalarGridSpec(
            num_scalar_prefetch=0,
            grid=(n_bt, T_pad // t_blk),
            in_specs=[
                pl.BlockSpec((t_blk, bt, 4 * H), lambda b, t: (t, b, 0)),   # xproj block (bf16)
                pl.BlockSpec((H, 4 * H), lambda b, t: (0, 0)),              # W_hh layer 0 (bf16)
                pl.BlockSpec((Lf, H, 4 * H), lambda b, t: (0, 0, 0)),       # W_ih layers >= 1
                pl.BlockSpec((Lf, H, 4 * H), lambda b, t: (0, 0, 0)),       # W_hh layers >= 1
                pl.BlockSpec((Lf, 1, 4 * H), lambda b, t: (0, 0, 0)),       # fused biases >= 1
            ],
            out_specs=pl.BlockSpec((t_blk, bt, H), lambda b, t: (t, b, 0)),
            scratch_shapes=[
                pltpu.VMEM((L, bt, H), jnp.bfloat16),   # h state (bf16, MXU-native)
                pltpu.VMEM((L, bt, H), jnp.float32),    # c state (f32)
            ],
        ),
        compiler_params=pltpu.CompilerParams(
            dimension_semantics=("parallel", "arbitrary"),
            vmem_limit_bytes=32 * 1024 * 1024),
    )(xproj, params["w_hh0_t"], params["w_ih_f"], params["w_hh_f"], params["b_f"])
    return h_top[:T]


# ---------------------------------------------------------------------------
# wrapper: embedding lookup + pack_padded_sequence gather (host-side glue)
# ---------------------------------------------------------------------------
def _packed_indices(lengths, T, B):
    # pack_padded_sequence order: for each t, batch elements with length > t
    # (lengths sorted descending, matching enforce_sorted=True).
    t_idx, b_idx = [], []
    for t in range(T):
        for b in range(B):
            if lengths[b] > t:
                t_idx.append(t)
                b_idx.append(b)
    return np.asarray(t_idx), np.asarray(b_idx)


def decoder_rnn_forward(params, features, captions, lengths):
    """Mirrors DecoderRNN.forward: returns (sum(lengths), num_vocab) logits."""
    embeddings = params["embed"][captions]                           # (B, S, E)
    seq = jnp.concatenate([features[:, None, :], embeddings], 1)     # (B, T, E)
    B, T, E = seq.shape
    H = params["w_hh0_t"].shape[0]
    V = params["b_fc"].shape[1]
    L = params["num_layers"]

    # pad batch to the sublane tile and go time-major; activations handed off in bf16
    B_pad = _round_up(B, 8)
    if B_pad != B:
        seq = jnp.pad(seq, ((0, B_pad - B), (0, 0), (0, 0)))
    x_tbe = jnp.transpose(seq, (1, 0, 2)).astype(jnp.bfloat16)       # (T, B_pad, E)

    # (1) batched layer-0 input projection (no recurrent dependency); bf16 output
    #     halves the xproj HBM write/read.
    xproj = _matmul_bias(x_tbe.reshape(T * B_pad, E), params["w_ih0_t"], params["b0"],
                         out_dtype=jnp.bfloat16)
    xproj = xproj.reshape(T, B_pad, 4 * H)

    # (2) sequential recurrence -> top-layer hidden states (bf16)
    h_top = _run_recurrence(xproj, params, num_layers=L, hidden_size=H)  # (T, B_pad, H)

    # (3) pack BEFORE the fc so only valid tokens hit the big matmul.
    # TODO(synk): pack_padded_sequence needs concrete host lengths; this gather cannot
    # live under jit with traced lengths.
    t_idx, b_idx = _packed_indices(list(lengths), T, B)
    h_packed = h_top[t_idx, b_idx]                                   # (sum(lengths), H)

    V_pad = _round_up(V, 128)
    w_fc, b_fc = params["w_fc_t"], params["b_fc"]
    if V_pad != V:
        w_fc = jnp.pad(w_fc, ((0, 0), (0, V_pad - V)))
        b_fc = jnp.pad(b_fc, ((0, 0), (0, V_pad - V)))
    logits = _matmul_bias(h_packed, w_fc, b_fc)                      # (P, V_pad) f32
    return logits[:, :V]                                             # (sum(lengths), V)


# ---------------------------------------------------------------------------
# pure-JAX reference with the same bf16 weight/activation quantization
# ---------------------------------------------------------------------------
def decoder_rnn_reference(params, features, captions, lengths):
    embeddings = params["embed"][captions]
    seq = jnp.concatenate([features[:, None, :], embeddings], 1)     # (B, T, E)
    B, T, E = seq.shape
    L = params["num_layers"]
    H = params["w_hh0_t"].shape[0]
    f32, bf16 = jnp.float32, jnp.bfloat16
    h = [jnp.zeros((B, H), bf16) for _ in range(L)]
    c = [jnp.zeros((B, H), f32) for _ in range(L)]
    outs = []
    for t in range(T):
        x_in = seq[:, t, :].astype(bf16)
        xp = (jnp.dot(x_in, params["w_ih0_t"], preferred_element_type=f32)
              + params["b0"]).astype(bf16)                           # bf16 xproj handoff
        g0 = xp.astype(f32) + jnp.dot(h[0], params["w_hh0_t"],
                                      preferred_element_type=f32)
        h0, c[0] = _lstm_cell(g0, c[0], H)
        h[0] = h0.astype(bf16)
        x = h[0]
        for l in range(1, L):
            g = (jnp.dot(x, params["w_ih_f"][l - 1], preferred_element_type=f32)
                 + jnp.dot(h[l], params["w_hh_f"][l - 1], preferred_element_type=f32)
                 + params["b_f"][l - 1])
            hl, c[l] = _lstm_cell(g, c[l], H)
            h[l] = hl.astype(bf16)
            x = h[l]
        outs.append(x)
    h_top = jnp.stack(outs)                                          # (T, B, H) bf16
    t_idx, b_idx = _packed_indices(list(lengths), T, B)
    h_packed = h_top[t_idx, b_idx]
    return (jnp.dot(h_packed, params["w_fc_t"], preferred_element_type=f32)
            + params["b_fc"])


# ---------------------------------------------------------------------------
# parameter init: PyTorch-layout weights, repacked for the kernels
# ---------------------------------------------------------------------------
def init_params(key, embed_size, hidden_size, num_vocab, num_layers):
    E, H, V, L = embed_size, hidden_size, num_vocab, num_layers
    ks = jax.random.split(key, 3 + 4 * L + 2)
    s = 1.0 / np.sqrt(H)
    u = lambda k, shape: jax.random.uniform(k, shape, jnp.float32, -s, s)

    embed = jax.random.normal(ks[0], (V, E), jnp.float32)
    # PyTorch LSTM params: weight_ih_l{k} (4H, in), weight_hh_l{k} (4H, H), gates [i,f,g,o]
    w_ih, w_hh, b_ih, b_hh = [], [], [], []
    idx = 1
    for l in range(L):
        in_dim = E if l == 0 else H
        w_ih.append(u(ks[idx + 0], (4 * H, in_dim)))
        w_hh.append(u(ks[idx + 1], (4 * H, H)))
        b_ih.append(u(ks[idx + 2], (4 * H,)))
        b_hh.append(u(ks[idx + 3], (4 * H,)))
        idx += 4
    w_fc = u(ks[idx], (V, H))
    b_fc = u(ks[idx + 1], (V,))

    bf16 = jnp.bfloat16
    # repack: pre-transposed, layer-0 split out, layers>=1 kept as separate W_ih / W_hh
    # stacks (two-dot recurrence), biases pre-added (f32), matmul weights bf16
    # (MXU-native; f32 accumulation).  This is an intentional precision choice vs the
    # f32 PyTorch module.
    w_ih0_t = w_ih[0].T.astype(bf16)                                 # (E, 4H)
    b0 = (b_ih[0] + b_hh[0]).reshape(1, 4 * H)                       # (1, 4H) f32
    w_hh0_t = w_hh[0].T.astype(bf16)                                 # (H, 4H)
    if L > 1:
        w_ih_f = jnp.stack([w_ih[l].T for l in range(1, L)]).astype(bf16)   # (L-1, H, 4H)
        w_hh_f = jnp.stack([w_hh[l].T for l in range(1, L)]).astype(bf16)   # (L-1, H, 4H)
        b_f = jnp.stack([(b_ih[l] + b_hh[l]).reshape(1, 4 * H)
                         for l in range(1, L)])                              # (L-1, 1, 4H)
    else:
        w_ih_f = jnp.zeros((1, H, 4 * H), bf16)                      # unused dummies
        w_hh_f = jnp.zeros((1, H, 4 * H), bf16)
        b_f = jnp.zeros((1, 1, 4 * H), jnp.float32)
    return {
        "embed": embed,
        "w_ih0_t": w_ih0_t, "b0": b0, "w_hh0_t": w_hh0_t,
        "w_ih_f": w_ih_f, "w_hh_f": w_hh_f, "b_f": b_f,
        "w_fc_t": w_fc.T.astype(bf16),                               # (H, V)
        "b_fc": b_fc.reshape(1, V),
        "num_layers": L,
    }


if __name__ == "__main__":
    embed_size = 128
    hidden_size = 128      # multiple of 128 -> lane-aligned gate slices
    num_vocab = 256        # multiple of 128 -> lane-dense fc output
    num_layers = 2
    B, S = 8, 9            # total sequence length T = S + 1 = 10
    lengths = [10, 9, 7, 7, 5, 4, 3, 2]   # sorted descending (pack_padded_sequence)

    key = jax.random.PRNGKey(0)
    kp, kf, kc = jax.random.split(key, 3)
    params = init_params(kp, embed_size, hidden_size, num_vocab, num_layers)
    features = jax.random.normal(kf, (B, embed_size), jnp.float32)
    captions = jax.random.randint(kc, (B, S), 0, num_vocab)

    out = decoder_rnn_forward(params, features, captions, lengths)
    out = jax.block_until_ready(out)
    ref = decoder_rnn_reference(params, features, captions, lengths)

    assert out.shape == (sum(lengths), num_vocab), out.shape
    np.testing.assert_allclose(np.asarray(out), np.asarray(ref), rtol=2e-2, atol=2e-2)
    print("KERNEL_OK")
</pallas_src>

<mosaic_0001>
module attributes {stable_mosaic.version = 11 : i64} {
  func.func @_matmul_bias_kernel(%arg0: i32, %arg1: i32, %arg2: memref<80x128xbf16, #tpu.memory_space<vmem>>, %arg3: memref<128x256xbf16, #tpu.memory_space<vmem>>, %arg4: memref<1x256xf32, #tpu.memory_space<vmem>>, %arg5: memref<80x256xbf16, #tpu.memory_space<vmem>>) attributes {dimension_semantics = [#tpu.dimension_semantics<parallel>, #tpu.dimension_semantics<parallel>], iteration_bounds = array<i64: 2, 1>, scalar_prefetch = 0 : i64, scratch_operands = 0 : i64, tpu.core_type = #tpu.core_type<tc>, window_params = [{transform_indices = @transform_0, window_bounds = array<i64: 80, 128>}, {transform_indices = @transform_1, window_bounds = array<i64: 128, 256>}, {transform_indices = @transform_2, window_bounds = array<i64: 1, 256>}, {transform_indices = @transform_3, window_bounds = array<i64: 80, 256>}]} {
    %c0 = arith.constant 0 : index
    %c0_0 = arith.constant 0 : index
    %0 = vector.load %arg2[%c0, %c0_0] : memref<80x128xbf16, #tpu.memory_space<vmem>>, vector<80x128xbf16>
    %c0_1 = arith.constant 0 : index
    %c0_2 = arith.constant 0 : index
    %1 = vector.load %arg3[%c0_1, %c0_2] : memref<128x256xbf16, #tpu.memory_space<vmem>>, vector<128x256xbf16>
    %cst = arith.constant dense<0.000000e+00> : vector<80x256xf32>
    %2 = tpu.matmul %0, %1, %cst {dimension_numbers = #tpu.dot_dimension_numbers<[1], [0], [0], [1], [0, 0, 1, 1], [], []>} : vector<80x128xbf16>, vector<128x256xbf16>, vector<80x256xf32> -> vector<80x256xf32>
    %c0_3 = arith.constant 0 : index
    %c0_4 = arith.constant 0 : index
    %3 = vector.load %arg4[%c0_3, %c0_4] : memref<1x256xf32, #tpu.memory_space<vmem>>, vector<1x256xf32>
    %4 = vector.broadcast %3 : vector<1x256xf32> to vector<80x256xf32>
    %5 = arith.addf %2, %4 : vector<80x256xf32>
    %6 = arith.truncf %5 : vector<80x256xf32> to vector<80x256xbf16>
    %c0_5 = arith.constant 0 : index
    %c0_6 = arith.constant 0 : index
    %7 = vector.load %arg5[%c0_5, %c0_6] : memref<80x256xbf16, #tpu.memory_space<vmem>>, vector<80x256xbf16>
    tpu.vector_store %arg5[%c0_5, %c0_6], %6 {strides = array<i32>} : memref<80x256xbf16, #tpu.memory_space<vmem>>, vector<80x256xbf16>,
    return
  }
  func.func @transform_0(%arg0: i32, %arg1: i32) -> (i32, i32) {
    %c0_i32 = arith.constant 0 : i32
    %c0_i32_0 = arith.constant 0 : i32
    return %arg1, %c0_i32 : i32, i32
  }
  func.func @transform_1(%arg0: i32, %arg1: i32) -> (i32, i32) {
    %c0_i32 = arith.constant 0 : i32
    %c0_i32_0 = arith.constant 0 : i32
    return %c0_i32, %arg0 : i32, i32
  }
  func.func @transform_2(%arg0: i32, %arg1: i32) -> (i32, i32) {
    %c0_i32 = arith.constant 0 : i32
    %c0_i32_0 = arith.constant 0 : i32
    return %c0_i32, %arg0 : i32, i32
  }
  func.func @transform_3(%arg0: i32, %arg1: i32) -> (i32, i32) {
    %c0_i32 = arith.constant 0 : i32
    return %arg1, %arg0 : i32, i32
  }
}

</mosaic_0001>

<llo_original>
// kernel: tpu_custom_call.1
$region0: #{tpu_custom_call.1}
  #allocation0 [shape = 'u32[]', space=smem, size = 0x4, offset = 0x4, fixed_abs, tag = 'smem constant byte address 0x4 - core index']
  #allocation1 [shape = 'u32[144,128]{1,0:T(1,128)}', space=vmem, size = 0x12000, scoped, tag = 'internal scratch']
  %s0 = inlined_call_operand.hbm [shape: bf16[80,128], index: 0, kind: input, shape index: {}]
  %s1 = inlined_call_operand.hbm [shape: bf16[128,512], index: 1, kind: input, shape index: {}]
  %s2 = inlined_call_operand.hbm [shape: f32[1,512], index: 2, kind: input, shape index: {}]
  %s3 = inlined_call_operand.hbm [shape: bf16[80,512], index: 3, kind: output, shape index: {}]
  %s4 = sld [smem:[#allocation0]]
  $region57: #{tpu_custom_call.1} parent=0
    _
  %s6 = ssub.s32 1, %s4
  %s7 = scalar_select 0, %s6, %s4
  $region1: #{tpu_custom_call.1} parent=0
    #allocation2 [shape = 'u8[20480]{0}', space=vmem, size = 0x5000, scoped, tag = 'input window, operand 0, single buffered']
    #allocation3 [shape = 's32[2]{0}', space=sflag, size = 0x8, scoped, tag = 'scoped memory for tpu_custom_call.1']
    #allocation4 [shape = 's32[2]{0}', space=sflag, size = 0x8, scoped, tag = 'scoped memory for tpu_custom_call.1']
    #allocation5 [shape = 'u8[131072]{0}', space=vmem, size = 0x20000, scoped, tag = 'input window, operand 1']
    #allocation6 [shape = 's32[2]{0}', space=sflag, size = 0x8, scoped, tag = 'scoped memory for tpu_custom_call.1']
    #allocation7 [shape = 'u8[2048]{0}', space=vmem, size = 0x800, scoped, tag = 'input window, operand 2']
    #allocation8 [shape = 'u8[81920]{0}', space=vmem, size = 0x14000, scoped, tag = 'output window, operand 0']
    %8 = vsyncpa [#allocation3], 0
    %9 = vsyncpa [#allocation6], 0
    %s10 = scalar_lea.sflag [#allocation6], 1
    %11 = vsyncpa %s10, 0
    %12 = vsyncpa [#allocation4], 0
    %s13 = scalar_lea.sflag [#allocation4], 1
    %14 = vsyncpa %s13, 0
    loop: start=0, step=1, limit=4
    $region2: #{tpu_custom_call.1} parent=1 // loop_pre_header
      _
    $region3: #{tpu_custom_call.1} parent=1 // loop_header
      %s16 = sphi 0, %s20
      %p17 = scmp.ge.s32.totalorder %s16, 4
      %s23 = sphi 0, %s35
      %s24 = sphi 0, %s31
      %s25 = sphi 0, %s23
      %s26 = sphi 0, %s24
      %s27 = sphi 0, %s25
      %s28 = sphi 0, %s26
      %s38 = sphi 0, %s40
      %s41 = sphi 0, %s38
      %s42 = sphi 0, %s41
      %s58 = sphi 0, %s42
      %s64 = sphi 0, %s66
      %s67 = sphi 0, %s64
      %s68 = sphi 0, %s67
      %s84 = sphi 0, %s68
      %s90 = sphi 0, %s92
      %s93 = sphi 0, %s90
      %s94 = sphi 0, %s93
      %s110 = sphi 0, %s94
      %s118 = sphi 0, %s120
      %s121 = sphi 0, %s118
      %s122 = sphi 0, %s121
      %s138 = sphi 0, %s122
    $region4: #{tpu_custom_call.1} parent=1 // loop_header_branch
      %19 = sbr.rel (%p17) target = $region8
    $region5: #{tpu_custom_call.1} parent=1 // loop_body
      %s21 = ssub.s32 %s16, 1
      %s22 = ssub.s32 %s16, 2
      %s29 = sadd.s32 1, %s24
      %p30 = scmp.ge.s32.totalorder %s29, 1
      %s31 = scalar_select %p30, 0, %s29
      %s32 = sadd.s32 1, %s23
      %s33 = scalar_select %p30, %s32, %s23
      %p34 = scmp.ge.s32.totalorder %s33, 2
      %s35 = scalar_select %p34, 0, %s33
      %s36 = ssub.s32 %s24, %s31
      %p37 = scmp.eq.s32.totalorder %s36, 0
      %s39 = sadd.s32 %s38, 1
      %s40 = scalar_select %p37, %s38, %s39
      %p43 = pneg %p37
      %p44 = scmp.eq.s32.totalorder %s16, 1
      %p45 = por %p43, %p44
      %p46 = scmp.ne.s32.totalorder %s38, %s41
      %p47 = scmp.eq.s32.totalorder %s16, 0
      %p48 = por %p46, %p47
      %p49 = scmp.ne.s32.totalorder %s38, %s41
      %p50 = scmp.eq.s32.totalorder %s21, 1
      %p51 = por %p49, %p50
      %p52 = scmp.ne.s32.totalorder %s41, %s42
      %p53 = scmp.eq.s32.totalorder %s21, 0
      %p54 = por %p52, %p53
      %p55 = scmp.ne.s32.totalorder %s41, %s42
      %p56 = scmp.eq.s32.totalorder %s22, 1
      %p57 = por %p55, %p56
      %p59 = scmp.ne.s32.totalorder %s42, %s58
      %p60 = scmp.eq.s32.totalorder %s22, 0
      %p61 = por %p59, %p60
      %s62 = ssub.s32 %s23, %s35
      %p63 = scmp.eq.s32.totalorder %s62, 0
      %s65 = sadd.s32 %s64, 1
      %s66 = scalar_select %p63, %s64, %s65
      %p69 = pneg %p63
      %p70 = scmp.eq.s32.totalorder %s16, 1
      %p71 = por %p69, %p70
      %p72 = scmp.ne.s32.totalorder %s64, %s67
      %p73 = scmp.eq.s32.totalorder %s16, 0
      %p74 = por %p72, %p73
      %p75 = scmp.ne.s32.totalorder %s64, %s67
      %p76 = scmp.eq.s32.totalorder %s21, 1
      %p77 = por %p75, %p76
      %p78 = scmp.ne.s32.totalorder %s67, %s68
      %p79 = scmp.eq.s32.totalorder %s21, 0
      %p80 = por %p78, %p79
      %p81 = scmp.ne.s32.totalorder %s67, %s68
      %p82 = scmp.eq.s32.totalorder %s22, 1
      %p83 = por %p81, %p82
      %p85 = scmp.ne.s32.totalorder %s68, %s84
      %p86 = scmp.eq.s32.totalorder %s22, 0
      %p87 = por %p85, %p86
      %s88 = ssub.s32 %s23, %s35
      %p89 = scmp.eq.s32.totalorder %s88, 0
      %s91 = sadd.s32 %s90, 1
      %s92 = scalar_select %p89, %s90, %s91
      %p95 = pneg %p89
      %p96 = scmp.eq.s32.totalorder %s16, 1
      %p97 = por %p95, %p96
      %p98 = scmp.ne.s32.totalorder %s90, %s93
      %p99 = scmp.eq.s32.totalorder %s16, 0
      %p100 = por %p98, %p99
      %p101 = scmp.ne.s32.totalorder %s90, %s93
      %p102 = scmp.eq.s32.totalorder %s21, 1
      %p103 = por %p101, %p102
      %p104 = scmp.ne.s32.totalorder %s93, %s94
      %p105 = scmp.eq.s32.totalorder %s21, 0
      %p106 = por %p104, %p105
      %p107 = scmp.ne.s32.totalorder %s93, %s94
      %p108 = scmp.eq.s32.totalorder %s22, 1
      %p109 = por %p107, %p108
      %p111 = scmp.ne.s32.totalorder %s94, %s110
      %p112 = scmp.eq.s32.totalorder %s22, 0
      %p113 = por %p111, %p112
      %s114 = ssub.s32 %s24, %s31
      %s115 = ssub.s32 %s23, %s35
      %s116 = sor.u32 %s114, %s115
      %p117 = scmp.eq.s32.totalorder %s116, 0
      %s119 = sadd.s32 %s118, 1
      %s120 = scalar_select %p117, %s118, %s119
      %p123 = pneg %p117
      %p124 = scmp.eq.s32.totalorder %s16, 1
      %p125 = por %p123, %p124
      %p126 = scmp.ne.s32.totalorder %s118, %s121
      %p127 = scmp.eq.s32.totalorder %s16, 0
      %p128 = por %p126, %p127
      %p129 = scmp.ne.s32.totalorder %s118, %s121
      %p130 = scmp.eq.s32.totalorder %s21, 1
      %p131 = por %p129, %p130
      %p132 = scmp.ne.s32.totalorder %s121, %s122
      %p133 = scmp.eq.s32.totalorder %s21, 0
      %p134 = por %p132, %p133
      %p135 = scmp.ne.s32.totalorder %s121, %s122
      %p136 = scmp.eq.s32.totalorder %s22, 1
      %p137 = por %p135, %p136
      %p139 = scmp.ne.s32.totalorder %s122, %s138
      %p140 = scmp.eq.s32.totalorder %s22, 0
      %p141 = por %p139, %p140
      %p142 = scmp.le.s32.totalorder 1, %s16
      %p143 = scmp.lt.s32.totalorder %s16, 3
      %p144 = pnand %p142, %p143
      %p145 = pneg %p144
      // Predicated region
      $region9: #{tpu_custom_call.1} parent=5 // pred_check
        _
      $region10: #{tpu_custom_call.1} parent=5 // pred_check_branch
        %147 = sbr.rel (%p144) target = $region12
      $region11: #{tpu_custom_call.1} parent=5 // pred_region
        %s148 = ssub.s32 %s16, 1
        // Predicated region
        $region13: #{tpu_custom_call.1} parent=11 // pred_check
          %p149 = pneg %p54
        $region14: #{tpu_custom_call.1} parent=11 // pred_check_branch
          %151 = sbr.rel (%p149) target = $region16
        $region15: #{tpu_custom_call.1} parent=11 // pred_region
          %s152 = smul.u32 10, %s26
          %s154 = ssub.s32 640, 640
          %155 = vsyncadd [#allocation3], %s154
          %s156 = smul.addr %s152, 64
          %s157 = scalar_lea.hbm %s0, %s156
          %s158 = sshll.u32 [#allocation2], 4
          %s159 = int_to_ptr.vmem [resolvable:$true] %s158
          %164 = dma.hbm_to_vmem [thread:$0]  %s157, 640, %s159, [#allocation3], 64, 64, 4
        $region16: #{tpu_custom_call.1} parent=11 // pred_fallthru
          _
      $region12: #{tpu_custom_call.1} parent=5 // pred_fallthru
        _
      %p165 = scmp.lt.s32.totalorder %s16, 2
      // Predicated region
      $region17: #{tpu_custom_call.1} parent=5 // pred_check
        %p166 = pneg %p165
      $region18: #{tpu_custom_call.1} parent=5 // pred_check_branch
        %168 = sbr.rel (%p166) target = $region20
      $region19: #{tpu_custom_call.1} parent=5 // pred_region
        // Predicated region
        $region21: #{tpu_custom_call.1} parent=19 // pred_check
          %p169 = pneg %p74
        $region22: #{tpu_custom_call.1} parent=19 // pred_check_branch
          %171 = sbr.rel (%p169) target = $region24
        $region23: #{tpu_custom_call.1} parent=19 // pred_region
          %s172 = sand.u32 %s16, 1
          %s173 = scalar_lea.sflag [#allocation6], %s172
          %s174 = sand.u32 %s64, 1
          %s175 = smul.addr %s174, 128
          %s176 = scalar_lea.vmem [#allocation5], %s175
          %s177 = smul.u32 2, %s23
          %s179 = ssub.s32 2048, 2048
          %180 = vsyncadd %s173, %s179
          %s181 = smul.addr %s177, 64
          %s182 = scalar_lea.hbm %s1, %s181
          %s183 = sshll.u32 %s176, 4
          %s184 = int_to_ptr.vmem [resolvable:$true] %s183
          %189 = dma.hbm_to_vmem [thread:$0]  %s182, 2048, %s184, %s173, 256, 128, 8
        $region24: #{tpu_custom_call.1} parent=19 // pred_fallthru
          _
        // Predicated region
        $region25: #{tpu_custom_call.1} parent=19 // pred_check
          %p190 = pneg %p100
        $region26: #{tpu_custom_call.1} parent=19 // pred_check_branch
          %192 = sbr.rel (%p190) target = $region28
        $region27: #{tpu_custom_call.1} parent=19 // pred_region
          %s193 = sand.u32 %s16, 1
          %s194 = scalar_lea.sflag [#allocation6], %s193
          %s195 = sand.u32 %s90, 1
          %s196 = smul.addr %s195, 2
          %s197 = scalar_lea.vmem [#allocation7], %s196
          %s198 = smul.u32 2, %s23
          %s200 = ssub.s32 32, 32
          %201 = vsyncadd %s194, %s200
          %s202 = smul.addr %s198, 16
          %s203 = scalar_lea.hbm %s2, %s202
          %s205 = sshll.u32 %s197, 4
          %s206 = int_to_ptr.vmem [resolvable:$true] %s205
          %208 = dma.hbm_to_vmem [thread:$0]  %s203, 32, %s206, %s194
        $region28: #{tpu_custom_call.1} parent=19 // pred_fallthru
          _
      $region20: #{tpu_custom_call.1} parent=5 // pred_fallthru
        _
      %p209 = scmp.le.s32.totalorder 1, %s16
      %p210 = scmp.lt.s32.totalorder %s16, 3
      %p211 = pnand %p209, %p210
      %p212 = pneg %p211
      // Predicated region
      $region29: #{tpu_custom_call.1} parent=5 // pred_check
        _
      $region30: #{tpu_custom_call.1} parent=5 // pred_check_branch
        %214 = sbr.rel (%p211) target = $region32
      $region31: #{tpu_custom_call.1} parent=5 // pred_region
        %s215 = ssub.s32 %s16, 1
        // Predicated region
        $region33: #{tpu_custom_call.1} parent=31 // pred_check
          %p216 = pneg %p54
        $region34: #{tpu_custom_call.1} parent=31 // pred_check_branch
          %218 = sbr.rel (%p216) target = $region36
        $region35: #{tpu_custom_call.1} parent=31 // pred_region
          %219 = dma.done [#allocation3], 640
        $region36: #{tpu_custom_call.1} parent=31 // pred_fallthru
          _
        %s220 = sand.u32 %s21, 1
        %s221 = scalar_lea.sflag [#allocation6], %s220
        %s222 = sand.u32 %s67, 1
        %s223 = smul.addr %s222, 128
        %s224 = scalar_lea.vmem [#allocation5], %s223
        // Predicated region
        $region37: #{tpu_custom_call.1} parent=31 // pred_check
          %p225 = pneg %p80
        $region38: #{tpu_custom_call.1} parent=31 // pred_check_branch
          %227 = sbr.rel (%p225) target = $region40
        $region39: #{tpu_custom_call.1} parent=31 // pred_region
          %228 = dma.done %s221, 2048
        $region40: #{tpu_custom_call.1} parent=31 // pred_fallthru
          _
        %s229 = sand.u32 %s21, 1
        %s230 = scalar_lea.sflag [#allocation6], %s229
        %s231 = sand.u32 %s93, 1
        %s232 = smul.addr %s231, 2
        %s233 = scalar_lea.vmem [#allocation7], %s232
        // Predicated region
        $region41: #{tpu_custom_call.1} parent=31 // pred_check
          %p234 = pneg %p106
        $region42: #{tpu_custom_call.1} parent=31 // pred_check_branch
          %236 = sbr.rel (%p234) target = $region44
        $region43: #{tpu_custom_call.1} parent=31 // pred_region
          %237 = dma.done %s230, 32
        $region44: #{tpu_custom_call.1} parent=31 // pred_fallthru
          _
        %p238 = pneg %p54
        %p239 = pneg %p51
        %s240 = sand.u32 %s21, 1
        %s241 = scalar_lea.sflag [#allocation6], %s240
        %s242 = sand.u32 %s67, 1
        %s243 = smul.addr %s242, 128
        %s244 = scalar_lea.vmem [#allocation5], %s243
        %p245 = pneg %p80
        %p246 = pneg %p77
        %s247 = sand.u32 %s21, 1
        %s248 = scalar_lea.sflag [#allocation6], %s247
        %s249 = sand.u32 %s93, 1
        %s250 = smul.addr %s249, 2
        %s251 = scalar_lea.vmem [#allocation7], %s250
        %p252 = pneg %p106
        %p253 = pneg %p103
        %p254 = pneg %p134
        %p255 = pneg %p131
        %s256 = sand.u32 %s121, 1
        %s257 = scalar_lea.sflag [#allocation4], %s256
        %s258 = sand.u32 %s121, 1
        %s259 = smul.addr %s258, 80
        %s260 = scalar_lea.vmem [#allocation8], %s259
        %s261 = smul.u32 10, %s26
        %s262 = smul.u32 2, %s25
        %s263 = smul.u32 2, %s25
        %s264 = smul.u32 10, %s26
        %s265 = smul.u32 2, %s25
        %v267 = vld [vmem:[#allocation2] sm:$0xf]
        %v268 = vld [vmem:[#allocation2 + $0x4] sm:$0xf]
        %v269 = vld [vmem:[#allocation2 + $0x8] sm:$0xf]
        %v270 = vld [vmem:[#allocation2 + $0xc] sm:$0xf]
        %v271 = vld [vmem:[#allocation2 + $0x10] sm:$0xf]
        %v272 = vld [vmem:[#allocation2 + $0x14] sm:$0xf]
        %v273 = vld [vmem:[#allocation2 + $0x18] sm:$0xf]
        %v274 = vld [vmem:[#allocation2 + $0x1c] sm:$0xf]
        %v275 = vld [vmem:[#allocation2 + $0x20] sm:$0xf]
        %v276 = vld [vmem:[#allocation2 + $0x24] sm:$0xf]
        %v277 = vld [vmem:[%s224] sm:$0xff]
        %v278 = vld [vmem:[%s224 + $0x8] sm:$0xff]
        %v279 = vld [vmem:[%s224 + $0x10] sm:$0xff]
        %v280 = vld [vmem:[%s224 + $0x18] sm:$0xff]
        %v281 = vld [vmem:[%s224 + $0x20] sm:$0xff]
        %v282 = vld [vmem:[%s224 + $0x28] sm:$0xff]
        %v283 = vld [vmem:[%s224 + $0x30] sm:$0xff]
        %v284 = vld [vmem:[%s224 + $0x38] sm:$0xff]
        %v285 = vld [vmem:[%s224 + $0x40] sm:$0xff]
        %v286 = vld [vmem:[%s224 + $0x48] sm:$0xff]
        %v287 = vld [vmem:[%s224 + $0x50] sm:$0xff]
        %v288 = vld [vmem:[%s224 + $0x58] sm:$0xff]
        %v289 = vld [vmem:[%s224 + $0x60] sm:$0xff]
        %v290 = vld [vmem:[%s224 + $0x68] sm:$0xff]
        %v291 = vld [vmem:[%s224 + $0x70] sm:$0xff]
        %v292 = vld [vmem:[%s224 + $0x78] sm:$0xff]
        %v293 = vld [vmem:[%s233] sm:$0x3]
        %v295 = vlaneseq
        %v296 = vshrl.u32 %v295, 7
        %v297 = vsub.s32 0, %v296
        %v298 = vrot.slane %v293, %v297
        %v299 = vlaneseq
        %v300 = vshrl.u32 %v299, 7
        %v301 = vsub.s32 1, %v300
        %v302 = vrot.slane %v293, %v301
        %v315 = vunpack.c.l.b16 %v267
        %v316 = vunpack.c.l.b16 %v268
        %v317 = vunpack.c.l.b16 %v269
        %v318 = vunpack.c.l.b16 %v270
        %v319 = vunpack.c.l.b16 %v271
        %v320 = vunpack.c.l.b16 %v272
        %v321 = vunpack.c.l.b16 %v273
        %v322 = vunpack.c.l.b16 %v274
        %v323 = vunpack.c.l.b16 %v275
        %v324 = vunpack.c.l.b16 %v276
        %v325 = vpack.c.b16 %v316, %v315
        %v326 = vpack.c.b16 %v318, %v317
        %v327 = vpack.c.b16 %v320, %v319
        %v328 = vpack.c.b16 %v322, %v321
        %v329 = vpack.c.b16 %v324, %v323
        %v351 = vunpack.c.l.b16 %v277
        %v352 = vunpack.c.h.b16 %v277
        %v353 = vunpack.c.l.b16 %v278
        %v354 = vunpack.c.h.b16 %v278
        %v355 = vunpack.c.l.b16 %v279
        %v356 = vunpack.c.h.b16 %v279
        %v357 = vunpack.c.l.b16 %v280
        %v358 = vunpack.c.h.b16 %v280
        %v359 = vunpack.c.l.b16 %v281
        %v360 = vunpack.c.h.b16 %v281
        %v361 = vunpack.c.l.b16 %v282
        %v362 = vunpack.c.h.b16 %v282
        %v363 = vunpack.c.l.b16 %v283
        %v364 = vunpack.c.h.b16 %v283
        %v365 = vunpack.c.l.b16 %v284
        %v366 = vunpack.c.h.b16 %v284
        %v367 = vunpack.c.l.b16 %v285
        %v368 = vunpack.c.h.b16 %v285
        %v369 = vunpack.c.l.b16 %v286
        %v370 = vunpack.c.h.b16 %v286
        %v371 = vunpack.c.l.b16 %v287
        %v372 = vunpack.c.h.b16 %v287
        %v373 = vunpack.c.l.b16 %v288
        %v374 = vunpack.c.h.b16 %v288
        %v375 = vunpack.c.l.b16 %v289
        %v376 = vunpack.c.h.b16 %v289
        %v377 = vunpack.c.l.b16 %v290
        %v378 = vunpack.c.h.b16 %v290
        %v379 = vunpack.c.l.b16 %v291
        %v380 = vunpack.c.h.b16 %v291
        %v381 = vunpack.c.l.b16 %v292
        %v382 = vunpack.c.h.b16 %v292
        %v383 = vpack.c.b16 %v353, %v351
        %v384 = vpack.c.b16 %v354, %v352
        %v385 = vpack.c.b16 %v357, %v355
        %v386 = vpack.c.b16 %v358, %v356
        %v387 = vpack.c.b16 %v361, %v359
        %v388 = vpack.c.b16 %v362, %v360
        %v389 = vpack.c.b16 %v365, %v363
        %v390 = vpack.c.b16 %v366, %v364
        %v391 = vpack.c.b16 %v369, %v367
        %v392 = vpack.c.b16 %v370, %v368
        %v393 = vpack.c.b16 %v373, %v371
        %v394 = vpack.c.b16 %v374, %v372
        %v395 = vpack.c.b16 %v377, %v375
        %v396 = vpack.c.b16 %v378, %v376
        %v397 = vpack.c.b16 %v381, %v379
        %v398 = vpack.c.b16 %v382, %v380
        %415 = vmatprep.subr.bf16.mxu0 %v398
        %416 = vmatpush1.bf16.msra.mxu0 %v397
        %417 = vmatprep.subr.bf16.mxu0 %v396
        %418 = vmatpush1.bf16.msra.mxu0 %v395
        %419 = vmatprep.subr.bf16.mxu0 %v394
        %420 = vmatpush1.bf16.msra.mxu0 %v393
        %421 = vmatprep.subr.bf16.mxu0 %v392
        %422 = vmatpush1.bf16.msra.mxu0 %v391
        %423 = vmatprep.subr.bf16.mxu0 %v390
        %424 = vmatpush1.bf16.msra.mxu0 %v389
        %425 = vmatprep.subr.bf16.mxu0 %v388
        %426 = vmatpush1.bf16.msra.mxu0 %v387
        %427 = vmatprep.subr.bf16.mxu0 %v386
        %428 = vmatpush1.bf16.msra.mxu0 %v385
        %429 = vmatprep.subr.bf16.mxu0 %v384
        %430 = vmatpush1.bf16.msra.mxu0 %v383
        %431 = vmatprep.subr.bf16.mxu0 0
        %432 = vmatpush2.bf16.msra.mxu0 0
        %433 = vmatprep.subr.bf16.mxu0 0
        %434 = vmatpush2.bf16.msra.mxu0 0
        %435 = vmatprep.subr.bf16.mxu0 0
        %436 = vmatpush2.bf16.msra.mxu0 0
        %437 = vmatprep.subr.bf16.mxu0 0
        %438 = vmatpush2.bf16.msra.mxu0 0
        %439 = vmatprep.subr.bf16.mxu0 0
        %440 = vmatpush2.bf16.msra.mxu0 0
        %441 = vmatprep.subr.bf16.mxu0 0
        %442 = vmatpush2.bf16.msra.mxu0 0
        %443 = vmatprep.subr.bf16.mxu0 0
        %444 = vmatpush2.bf16.msra.mxu0 0
        %445 = vmatprep.subr.bf16.mxu0 0
        %446 = vmatpush2.bf16.msra.mxu0 0
        %447 = vmatprep.mubr.bf16.mxu0 0
        %448 = vmatmul.mubr.bf16.gmra.mxu0 %v325
        %v449 = vpop.f32.mrf.mxu0
        %v450 = vadd.f32 %v298, %v449
        %v451 = vpop.f32.mrf.mxu0
        %v452 = vadd.f32 %v302, %v451
        %v453 = vpop.f32.mrf.mxu0
        %v454 = vadd.f32 %v298, %v453
        %v455 = vpop.f32.mrf.mxu0
        %v456 = vadd.f32 %v302, %v455
        %457 = vmatprep.mubr.bf16.mxu0 0
        %458 = vmatmul.mubr.bf16.gmra.mxu0 %v326
        %v459 = vpop.f32.mrf.mxu0
        %v460 = vadd.f32 %v298, %v459
        %v461 = vpop.f32.mrf.mxu0
        %v462 = vadd.f32 %v302, %v461
        %v463 = vpop.f32.mrf.mxu0
        %v464 = vadd.f32 %v298, %v463
        %v465 = vpop.f32.mrf.mxu0
        %v466 = vadd.f32 %v302, %v465
        %467 = vmatprep.mubr.bf16.mxu0 0
        %468 = vmatmul.mubr.bf16.gmra.mxu0 %v327
        %v469 = vpop.f32.mrf.mxu0
        %v470 = vadd.f32 %v298, %v469
        %v471 = vpop.f32.mrf.mxu0
        %v472 = vadd.f32 %v302, %v471
        %v473 = vpop.f32.mrf.mxu0
        %v474 = vadd.f32 %v298, %v473
        %v475 = vpop.f32.mrf.mxu0
        %v476 = vadd.f32 %v302, %v475
        %477 = vmatprep.mubr.bf16.mxu0 0
        %478 = vmatmul.mubr.bf16.gmra.mxu0 %v328
        %v479 = vpop.f32.mrf.mxu0
        %v480 = vadd.f32 %v298, %v479
        %v481 = vpop.f32.mrf.mxu0
        %v482 = vadd.f32 %v302, %v481
        %v483 = vpop.f32.mrf.mxu0
        %v484 = vadd.f32 %v298, %v483
        %v485 = vpop.f32.mrf.mxu0
        %v486 = vadd.f32 %v302, %v485
        %487 = vmatprep.mubr.bf16.mxu0 0
        %488 = vmatmul.mubr.bf16.gmra.mxu0 %v329
        %v489 = vpop.f32.mrf.mxu0
        %v490 = vadd.f32 %v298, %v489
        %v491 = vpop.f32.mrf.mxu0
        %v492 = vadd.f32 %v302, %v491
        %v493 = vpop.f32.mrf.mxu0
        %v494 = vadd.f32 %v298, %v493
        %v495 = vpop.f32.mrf.mxu0
        %v496 = vadd.f32 %v302, %v495
        %497 = vdwg.mxu0
        %v498 = vpack.c.bf16 %v454, %v450
        %v499 = vpack.c.bf16 %v456, %v452
        %v500 = vpack.c.bf16 %v464, %v460
        %v501 = vpack.c.bf16 %v466, %v462
        %v502 = vpack.c.bf16 %v474, %v470
        %v503 = vpack.c.bf16 %v476, %v472
        %v504 = vpack.c.bf16 %v484, %v480
        %v505 = vpack.c.bf16 %v486, %v482
        %v506 = vpack.c.bf16 %v494, %v490
        %v507 = vpack.c.bf16 %v496, %v492
        %v518 = vunpack.c.l.b16 %v498
        %v519 = vunpack.c.l.b16 %v499
        %v520 = vunpack.c.h.b16 %v498
        %v521 = vunpack.c.h.b16 %v499
        %v522 = vunpack.c.l.b16 %v500
        %v523 = vunpack.c.l.b16 %v501
        %v524 = vunpack.c.h.b16 %v500
        %v525 = vunpack.c.h.b16 %v501
        %v526 = vunpack.c.l.b16 %v502
        %v527 = vunpack.c.l.b16 %v503
        %v528 = vunpack.c.h.b16 %v502
        %v529 = vunpack.c.h.b16 %v503
        %v530 = vunpack.c.l.b16 %v504
        %v531 = vunpack.c.l.b16 %v505
        %v532 = vunpack.c.h.b16 %v504
        %v533 = vunpack.c.h.b16 %v505
        %v534 = vunpack.c.l.b16 %v506
        %v535 = vunpack.c.l.b16 %v507
        %v536 = vunpack.c.h.b16 %v506
        %v537 = vunpack.c.h.b16 %v507
        %v538 = vpack.c.b16 %v519, %v518
        %v539 = vpack.c.b16 %v521, %v520
        %v540 = vpack.c.b16 %v523, %v522
        %v541 = vpack.c.b16 %v525, %v524
        %v542 = vpack.c.b16 %v527, %v526
        %v543 = vpack.c.b16 %v529, %v528
        %v544 = vpack.c.b16 %v531, %v530
        %v545 = vpack.c.b16 %v533, %v532
        %v546 = vpack.c.b16 %v535, %v534
        %v547 = vpack.c.b16 %v537, %v536
        %558 = vst [vmem:[%s260] sm:$0xff] %v538
        %559 = vst [vmem:[%s260 + $0x8] sm:$0xff] %v539
        %560 = vst [vmem:[%s260 + $0x10] sm:$0xff] %v540
        %561 = vst [vmem:[%s260 + $0x18] sm:$0xff] %v541
        %562 = vst [vmem:[%s260 + $0x20] sm:$0xff] %v542
        %563 = vst [vmem:[%s260 + $0x28] sm:$0xff] %v543
        %564 = vst [vmem:[%s260 + $0x30] sm:$0xff] %v544
        %565 = vst [vmem:[%s260 + $0x38] sm:$0xff] %v545
        %566 = vst [vmem:[%s260 + $0x40] sm:$0xff] %v546
        %567 = vst [vmem:[%s260 + $0x48] sm:$0xff] %v547
        %s568 = sand.u32 %s121, 1
        %s569 = scalar_lea.sflag [#allocation4], %s568
        %s570 = sand.u32 %s121, 1
        %s571 = smul.addr %s570, 80
        %s572 = scalar_lea.vmem [#allocation8], %s571
        // Predicated region
        $region45: #{tpu_custom_call.1} parent=31 // pred_check
          %p573 = pneg %p131
        $region46: #{tpu_custom_call.1} parent=31 // pred_check_branch
          %575 = sbr.rel (%p573) target = $region48
        $region47: #{tpu_custom_call.1} parent=31 // pred_region
          %s576 = smul.u32 10, %s26
          %s577 = smul.u32 2, %s25
          %s579 = ssub.s32 1280, 1280
          %580 = vsyncadd %s569, %s579
          %s581 = smul.addr %s576, 4
          %s582 = sadd.s32 %s577, %s581
          %s583 = smul.addr %s582, 64
          %s584 = scalar_lea.hbm %s3, %s583
          %s585 = sshll.u32 %s572, 4
          %s586 = int_to_ptr.vmem [resolvable:$true] %s585
          %591 = dma.vmem_to_hbm [thread:$0]  %s586, 1280, %s584, %s569, 128, 256, 8
        $region48: #{tpu_custom_call.1} parent=31 // pred_fallthru
          _
      $region32: #{tpu_custom_call.1} parent=5 // pred_fallthru
        _
      %p592 = scmp.le.s32.totalorder 2, %s16
      // Predicated region
      $region49: #{tpu_custom_call.1} parent=5 // pred_check
        %p593 = pneg %p592
      $region50: #{tpu_custom_call.1} parent=5 // pred_check_branch
        %595 = sbr.rel (%p593) target = $region52
      $region51: #{tpu_custom_call.1} parent=5 // pred_region
        %s596 = ssub.s32 %s16, 2
        // Predicated region
        $region53: #{tpu_custom_call.1} parent=51 // pred_check
          %p597 = pneg %p137
        $region54: #{tpu_custom_call.1} parent=51 // pred_check_branch
          %599 = sbr.rel (%p597) target = $region56
        $region55: #{tpu_custom_call.1} parent=51 // pred_region
          %s600 = sand.u32 %s122, 1
          %s601 = scalar_lea.sflag [#allocation4], %s600
          %s602 = sand.u32 %s122, 1
          %s603 = smul.addr %s602, 80
          %s604 = scalar_lea.vmem [#allocation8], %s603
          %605 = dma.done %s601, 1280
        $region56: #{tpu_custom_call.1} parent=51 // pred_fallthru
          _
      $region52: #{tpu_custom_call.1} parent=5 // pred_fallthru
        _
    $region6: #{tpu_custom_call.1} parent=1 // loop_footer
      %s20 = sadd.s32 1, %s16
    $region7: #{tpu_custom_call.1} parent=1 // loop_footer_branch
      %15 = sbr.rel target = $region3
    $region8: #{tpu_custom_call.1} parent=1 // loop_exit
      _
    %606 = vsyncpa [#allocation3], 1
    %s607 = scalar_lea.sflag [#allocation3], 1
    %608 = vsyncpa %s607, 1
    %609 = vsyncpa [#allocation6], 1
    %s610 = scalar_lea.sflag [#allocation6], 1
    %611 = vsyncpa %s610, 1
    %612 = vsyncpa [#allocation4], 1
    %s613 = scalar_lea.sflag [#allocation4], 1
    %614 = vsyncpa %s613, 1

</llo_original>
